<compile_context>
chip_gen: v5e
topology: v5e:2x2
jax: 0.10.0
libtpu: 0.0.40
codegen_flags: <defaults>
</compile_context>

<pallas_src>
import functools

import jax
import jax.numpy as jnp
from jax.experimental import pallas as pl
from jax.experimental.pallas import tpu as pltpu


def _round_up(n, m):
    return ((n + m - 1) // m) * m


# --------------------------------------------------------------------------- #
# Kernel
# --------------------------------------------------------------------------- #
def _mlp_kernel(x_ref, w1_ref, b1_ref, w2_ref, b2_ref, w3_ref, b3_ref, out_ref):
    # x arrives f32 at its true feature width; cast to bf16 only for the MXU.
    x = x_ref[...].astype(jnp.bfloat16)

    # fc1: f32 accumulation, f32 bias add, downcast, then ReLU (commutes with cast).
    h1 = jnp.dot(x, w1_ref[...], preferred_element_type=jnp.float32) + b1_ref[...]
    h1 = jnp.maximum(h1.astype(jnp.bfloat16), 0)

    # fc2
    h2 = jnp.dot(h1, w2_ref[...], preferred_element_type=jnp.float32) + b2_ref[...]
    h2 = jnp.maximum(h2.astype(jnp.bfloat16), 0)

    # fc3 (no activation)
    y = jnp.dot(h2, w3_ref[...], preferred_element_type=jnp.float32) + b3_ref[...]
    out_ref[...] = y.astype(out_ref.dtype)


# --------------------------------------------------------------------------- #
# One-time parameter repack (outside the per-call path)
# --------------------------------------------------------------------------- #
def prepare_mlp_params(params):
    """Pad output (lane) dims to multiples of 128, cast weights to bf16, biases f32.
    Contraction dim of w1 keeps the true state_dim so x never needs host padding."""
    state_dim, hidden_dim = params["w1"].shape
    action_dim = params["w3"].shape[1]
    h_pad = _round_up(hidden_dim, 128)
    a_pad = _round_up(action_dim, 128)

    def padw(w, rows, cols):
        return jnp.pad(
            w, ((0, rows - w.shape[0]), (0, cols - w.shape[1]))
        ).astype(jnp.bfloat16)

    def padb(b, cols):
        return jnp.pad(b, ((0, 0), (0, cols - b.shape[1]))).astype(jnp.float32)

    return {
        "w1": padw(params["w1"], state_dim, h_pad),
        "b1": padb(params["b1"], h_pad),
        "w2": padw(params["w2"], h_pad, h_pad),
        "b2": padb(params["b2"], h_pad),
        "w3": padw(params["w3"], h_pad, a_pad),
        "b3": padb(params["b3"], a_pad),
    }


# --------------------------------------------------------------------------- #
# Forward wrapper
# --------------------------------------------------------------------------- #
@functools.partial(jax.jit, static_argnames=("action_dim", "tile_m"))
def mlp_forward(x, params, *, action_dim, tile_m=2048):
    """x: (batch, state_dim) f32. params: output of prepare_mlp_params."""
    batch, state_dim = x.shape
    h_pad = params["w1"].shape[1]
    a_pad = params["w3"].shape[1]
    assert params["w1"].shape[0] == state_dim

    # --- batch tile selection ------------------------------------------------
    b16 = _round_up(batch, 16)                      # bf16 sublane quantum
    # Keep >= 2 grid steps when the batch allows it (v7x megacore sharding).
    tm = min(_round_up(tile_m, 16), _round_up(pl.cdiv(b16, 2), 16))
    tm = max(tm, 16)

    # Shrink tm until the per-step working set fits a conservative VMEM budget
    # (safe on v7x's 64 MiB; v5e/v6e have far more headroom).
    weight_bytes = sum(
        params[k].size * params[k].dtype.itemsize
        for k in ("w1", "b1", "w2", "b2", "w3", "b3")
    )

    def vmem_bytes(t):
        return (
            2 * t * state_dim * 4          # x (f32), double-buffered
            + 2 * t * a_pad * 4            # out (f32), double-buffered
            + 2 * weight_bytes             # resident weights/biases (x2 buffers)
            + 2 * t * h_pad * (4 + 2)      # h1/h2 f32 accumulators + bf16 copies
        )

    budget = 40 * 1024 * 1024
    while tm > 16 and vmem_bytes(tm) > budget:
        tm = _round_up(tm // 2, 16)

    # Pad batch only to the sublane quantum (no-op when batch % 16 == 0).
    xp = jnp.pad(x, ((0, b16 - batch), (0, 0))) if b16 != batch else x

    grid = (pl.cdiv(b16, tm),)

    def const_spec(shape):
        # Weights / biases: same block every grid step -> resident in VMEM.
        return pl.BlockSpec(shape, lambda i: (0, 0))

    flops = 2 * b16 * (state_dim * h_pad + h_pad * h_pad + h_pad * a_pad)
    bytes_accessed = xp.size * 4 + weight_bytes + b16 * a_pad * 4

    out = pl.pallas_call(
        _mlp_kernel,
        out_shape=jax.ShapeDtypeStruct((b16, a_pad), jnp.float32),
        grid=grid,
        in_specs=[
            pl.BlockSpec((tm, state_dim), lambda i: (i, 0)),
            const_spec((state_dim, h_pad)), const_spec((1, h_pad)),
            const_spec((h_pad, h_pad)), const_spec((1, h_pad)),
            const_spec((h_pad, a_pad)), const_spec((1, a_pad)),
        ],
        out_specs=pl.BlockSpec((tm, a_pad), lambda i: (i, 0)),
        compiler_params=pltpu.CompilerParams(
            dimension_semantics=("parallel",),       # megacore sharding on v7x
            vmem_limit_bytes=48 * 1024 * 1024,       # valid on v5e/v6e/v7x
        ),
        cost_estimate=pl.CostEstimate(
            flops=flops, transcendentals=0, bytes_accessed=bytes_accessed
        ),
    )(xp, params["w1"], params["b1"], params["w2"], params["b2"],
      params["w3"], params["b3"])

    # Slice away batch / lane padding.
    return out[:batch, :action_dim]


# --------------------------------------------------------------------------- #
# Init + reference
# --------------------------------------------------------------------------- #
def init_mlp_params(key, state_dim, action_dim, hidden_dim=400, dtype=jnp.float32):
    """PyTorch nn.Linear-style uniform init; weights stored pre-transposed (in, out)."""
    def linear(k, fan_in, fan_out):
        kw, kb = jax.random.split(k)
        bound = 1.0 / jnp.sqrt(jnp.asarray(fan_in, dtype=jnp.float32))
        w = jax.random.uniform(kw, (fan_in, fan_out), dtype, -bound, bound)
        b = jax.random.uniform(kb, (1, fan_out), dtype, -bound, bound)
        return w, b

    k1, k2, k3 = jax.random.split(key, 3)
    w1, b1 = linear(k1, state_dim, hidden_dim)
    w2, b2 = linear(k2, hidden_dim, hidden_dim)
    w3, b3 = linear(k3, hidden_dim, action_dim)
    return {"w1": w1, "b1": b1, "w2": w2, "b2": b2, "w3": w3, "b3": b3}


def mlp_reference(x, params):
    """Pure-JAX reference matching the kernel's numerics:
    bf16-rounded matmul operands, f32 products/accumulation, f32 bias, ReLU."""
    def bf(a):
        return a.astype(jnp.bfloat16).astype(jnp.float32)

    hp = jax.lax.Precision.HIGHEST
    h = jnp.maximum(jnp.dot(bf(x), bf(params["w1"]), precision=hp) + params["b1"], 0.0)
    h = jnp.maximum(jnp.dot(bf(h), bf(params["w2"]), precision=hp) + params["b2"], 0.0)
    return jnp.dot(bf(h), bf(params["w3"]), precision=hp) + params["b3"]


if __name__ == "__main__":
    key = jax.random.PRNGKey(0)
    k_params, k_x = jax.random.split(key)

    batch, state_dim, action_dim, hidden_dim = 2, 8, 4, 32
    params = init_mlp_params(k_params, state_dim, action_dim, hidden_dim)
    prepared = prepare_mlp_params(params)
    x = jax.random.normal(k_x, (batch, state_dim), dtype=jnp.float32)

    out = mlp_forward(x, prepared, action_dim=action_dim)
    out = jax.block_until_ready(out)

    ref = mlp_reference(x, params)
    assert out.shape == (batch, action_dim)
    assert jnp.allclose(out, ref, atol=2e-3, rtol=2e-3), "mismatch vs reference"

    print("KERNEL_OK")
</pallas_src>

<mosaic_0001>
module attributes {stable_mosaic.version = 11 : i64} {
  func.func @_mlp_kernel(%arg0: i32, %arg1: memref<16x8xf32, #tpu.memory_space<vmem>>, %arg2: memref<8x128xbf16, #tpu.memory_space<vmem>>, %arg3: memref<1x128xf32, #tpu.memory_space<vmem>>, %arg4: memref<128x128xbf16, #tpu.memory_space<vmem>>, %arg5: memref<1x128xf32, #tpu.memory_space<vmem>>, %arg6: memref<128x128xbf16, #tpu.memory_space<vmem>>, %arg7: memref<1x128xf32, #tpu.memory_space<vmem>>, %arg8: memref<16x128xf32, #tpu.memory_space<vmem>>) attributes {dimension_semantics = [#tpu.dimension_semantics<parallel>], iteration_bounds = array<i64: 1>, scalar_prefetch = 0 : i64, scratch_operands = 0 : i64, tpu.core_type = #tpu.core_type<tc>, window_params = [{transform_indices = @transform_0, window_bounds = array<i64: 16, 8>}, {pipeline_mode = #tpu.pipeline_mode<synchronous>, transform_indices = @transform_1, window_bounds = array<i64: 8, 128>}, {pipeline_mode = #tpu.pipeline_mode<synchronous>, transform_indices = @transform_2, window_bounds = array<i64: 1, 128>}, {pipeline_mode = #tpu.pipeline_mode<synchronous>, transform_indices = @transform_3, window_bounds = array<i64: 128, 128>}, {pipeline_mode = #tpu.pipeline_mode<synchronous>, transform_indices = @transform_4, window_bounds = array<i64: 1, 128>}, {pipeline_mode = #tpu.pipeline_mode<synchronous>, transform_indices = @transform_5, window_bounds = array<i64: 128, 128>}, {pipeline_mode = #tpu.pipeline_mode<synchronous>, transform_indices = @transform_6, window_bounds = array<i64: 1, 128>}, {transform_indices = @transform_7, window_bounds = array<i64: 16, 128>}]} {
    %c0 = arith.constant 0 : index
    %c0_0 = arith.constant 0 : index
    %0 = vector.load %arg1[%c0, %c0_0] : memref<16x8xf32, #tpu.memory_space<vmem>>, vector<16x8xf32>
    %1 = arith.truncf %0 : vector<16x8xf32> to vector<16x8xbf16>
    %c0_1 = arith.constant 0 : index
    %c0_2 = arith.constant 0 : index
    %2 = vector.load %arg2[%c0_1, %c0_2] : memref<8x128xbf16, #tpu.memory_space<vmem>>, vector<8x128xbf16>
    %cst = arith.constant dense<0.000000e+00> : vector<16x128xf32>
    %3 = tpu.matmul %1, %2, %cst {dimension_numbers = #tpu.dot_dimension_numbers<[1], [0], [0], [1], [0, 0, 1, 1], [], []>} : vector<16x8xbf16>, vector<8x128xbf16>, vector<16x128xf32> -> vector<16x128xf32>
    %c0_3 = arith.constant 0 : index
    %c0_4 = arith.constant 0 : index
    %4 = vector.load %arg3[%c0_3, %c0_4] : memref<1x128xf32, #tpu.memory_space<vmem>>, vector<1x128xf32>
    %5 = vector.broadcast %4 : vector<1x128xf32> to vector<16x128xf32>
    %6 = arith.addf %3, %5 : vector<16x128xf32>
    %7 = arith.truncf %6 : vector<16x128xf32> to vector<16x128xbf16>
    %cst_5 = arith.constant 0.000000e+00 : bf16
    %8 = vector.broadcast %cst_5 : bf16 to vector<16x128xbf16>
    %9 = arith.maximumf %7, %8 : vector<16x128xbf16>
    %c0_6 = arith.constant 0 : index
    %c0_7 = arith.constant 0 : index
    %10 = vector.load %arg4[%c0_6, %c0_7] : memref<128x128xbf16, #tpu.memory_space<vmem>>, vector<128x128xbf16>
    %cst_8 = arith.constant dense<0.000000e+00> : vector<16x128xf32>
    %11 = tpu.matmul %9, %10, %cst_8 {dimension_numbers = #tpu.dot_dimension_numbers<[1], [0], [0], [1], [0, 0, 1, 1], [], []>} : vector<16x128xbf16>, vector<128x128xbf16>, vector<16x128xf32> -> vector<16x128xf32>
    %c0_9 = arith.constant 0 : index
    %c0_10 = arith.constant 0 : index
    %12 = vector.load %arg5[%c0_9, %c0_10] : memref<1x128xf32, #tpu.memory_space<vmem>>, vector<1x128xf32>
    %13 = vector.broadcast %12 : vector<1x128xf32> to vector<16x128xf32>
    %14 = arith.addf %11, %13 : vector<16x128xf32>
    %15 = arith.truncf %14 : vector<16x128xf32> to vector<16x128xbf16>
    %cst_11 = arith.constant 0.000000e+00 : bf16
    %16 = vector.broadcast %cst_11 : bf16 to vector<16x128xbf16>
    %17 = arith.maximumf %15, %16 : vector<16x128xbf16>
    %c0_12 = arith.constant 0 : index
    %c0_13 = arith.constant 0 : index
    %18 = vector.load %arg6[%c0_12, %c0_13] : memref<128x128xbf16, #tpu.memory_space<vmem>>, vector<128x128xbf16>
    %cst_14 = arith.constant dense<0.000000e+00> : vector<16x128xf32>
    %19 = tpu.matmul %17, %18, %cst_14 {dimension_numbers = #tpu.dot_dimension_numbers<[1], [0], [0], [1], [0, 0, 1, 1], [], []>} : vector<16x128xbf16>, vector<128x128xbf16>, vector<16x128xf32> -> vector<16x128xf32>
    %c0_15 = arith.constant 0 : index
    %c0_16 = arith.constant 0 : index
    %20 = vector.load %arg7[%c0_15, %c0_16] : memref<1x128xf32, #tpu.memory_space<vmem>>, vector<1x128xf32>
    %21 = vector.broadcast %20 : vector<1x128xf32> to vector<16x128xf32>
    %22 = arith.addf %19, %21 : vector<16x128xf32>
    %c0_17 = arith.constant 0 : index
    %c0_18 = arith.constant 0 : index
    %23 = vector.load %arg8[%c0_17, %c0_18] : memref<16x128xf32, #tpu.memory_space<vmem>>, vector<16x128xf32>
    tpu.vector_store %arg8[%c0_17, %c0_18], %22 {strides = array<i32>} : memref<16x128xf32, #tpu.memory_space<vmem>>, vector<16x128xf32>,
    return
  }
  func.func @transform_0(%arg0: i32) -> (i32, i32) {
    %c0_i32 = arith.constant 0 : i32
    %c0_i32_0 = arith.constant 0 : i32
    return %arg0, %c0_i32 : i32, i32
  }
  func.func @transform_1(%arg0: i32) -> (i32, i32) {
    %c0_i32 = arith.constant 0 : i32
    %c0_i32_0 = arith.constant 0 : i32
    %c0_i32_1 = arith.constant 0 : i32
    return %c0_i32, %c0_i32_0 : i32, i32
  }
  func.func @transform_2(%arg0: i32) -> (i32, i32) {
    %c0_i32 = arith.constant 0 : i32
    %c0_i32_0 = arith.constant 0 : i32
    %c0_i32_1 = arith.constant 0 : i32
    return %c0_i32, %c0_i32_0 : i32, i32
  }
  func.func @transform_3(%arg0: i32) -> (i32, i32) {
    %c0_i32 = arith.constant 0 : i32
    %c0_i32_0 = arith.constant 0 : i32
    %c0_i32_1 = arith.constant 0 : i32
    return %c0_i32, %c0_i32_0 : i32, i32
  }
  func.func @transform_4(%arg0: i32) -> (i32, i32) {
    %c0_i32 = arith.constant 0 : i32
    %c0_i32_0 = arith.constant 0 : i32
    %c0_i32_1 = arith.constant 0 : i32
    return %c0_i32, %c0_i32_0 : i32, i32
  }
  func.func @transform_5(%arg0: i32) -> (i32, i32) {
    %c0_i32 = arith.constant 0 : i32
    %c0_i32_0 = arith.constant 0 : i32
    %c0_i32_1 = arith.constant 0 : i32
    return %c0_i32, %c0_i32_0 : i32, i32
  }
  func.func @transform_6(%arg0: i32) -> (i32, i32) {
    %c0_i32 = arith.constant 0 : i32
    %c0_i32_0 = arith.constant 0 : i32
    %c0_i32_1 = arith.constant 0 : i32
    return %c0_i32, %c0_i32_0 : i32, i32
  }
  func.func @transform_7(%arg0: i32) -> (i32, i32) {
    %c0_i32 = arith.constant 0 : i32
    %c0_i32_0 = arith.constant 0 : i32
    return %arg0, %c0_i32 : i32, i32
  }
}

</mosaic_0001>

<llo_original>
// kernel: mlp_forward.1
$region0: #{mlp_forward.1}
  #allocation0 [shape = 'u32[]', space=smem, size = 0x4, offset = 0x4, fixed_abs, tag = 'smem constant byte address 0x4 - core index']
  #allocation1 [shape = 'u32[72,128]{1,0:T(1,128)}', space=vmem, size = 0x9000, scoped, tag = 'internal scratch']
  %s0 = inlined_call_operand.vmem [shape: f32[16,8], index: 0, kind: input, shape index: {}]
  %s1 = inlined_call_operand.vmem [shape: bf16[8,128], index: 1, kind: input, shape index: {}]
  %s2 = inlined_call_operand.vmem [shape: f32[1,128], index: 2, kind: input, shape index: {}]
  %s3 = inlined_call_operand.hbm [shape: bf16[128,128], index: 3, kind: input, shape index: {}]
  %s4 = inlined_call_operand.vmem [shape: f32[1,128], index: 4, kind: input, shape index: {}]
  %s5 = inlined_call_operand.hbm [shape: bf16[128,128], index: 5, kind: input, shape index: {}]
  %s6 = inlined_call_operand.vmem [shape: f32[1,128], index: 6, kind: input, shape index: {}]
  %s7 = inlined_call_operand.vmem [shape: f32[16,128], index: 7, kind: output, shape index: {}]
  %s8 = sld [smem:[#allocation0]]
  $region46: #{mlp_forward.1} parent=0
    _
  %s10 = ssub.s32 1, %s8
  %s11 = scalar_select 0, %s10, %s8
  $region1: #{mlp_forward.1} parent=0
    #allocation2 [shape = 'u8[32768]{0}', space=vmem, size = 0x8000, scoped, tag = 'input window, operand 3, single buffered']
    #allocation3 [shape = 's32[1]{0}', space=sflag, size = 0x4, scoped, tag = 'scoped memory for mlp_forward.1']
    #allocation4 [shape = 'u8[32768]{0}', space=vmem, size = 0x8000, scoped, tag = 'input window, operand 5, single buffered']
    #allocation5 [shape = 's32[1]{0}', space=sflag, size = 0x4, scoped, tag = 'scoped memory for mlp_forward.1']
    %12 = vsyncpa [#allocation3], 0
    %13 = vsyncpa [#allocation5], 0
    // Predicated region
    $region2: #{mlp_forward.1} parent=1 // pred_check
      _
    $region3: #{mlp_forward.1} parent=1 // pred_check_branch
      %15 = sbr.rel (0) target = $region5
    $region4: #{mlp_forward.1} parent=1 // pred_region
      _
    $region5: #{mlp_forward.1} parent=1 // pred_fallthru
      _
    // Predicated region
    $region6: #{mlp_forward.1} parent=1 // pred_check
      _
    $region7: #{mlp_forward.1} parent=1 // pred_check_branch
      %17 = sbr.rel (0) target = $region9
    $region8: #{mlp_forward.1} parent=1 // pred_region
      _
    $region9: #{mlp_forward.1} parent=1 // pred_fallthru
      _
    // Predicated region
    $region10: #{mlp_forward.1} parent=1 // pred_check
      _
    $region11: #{mlp_forward.1} parent=1 // pred_check_branch
      %19 = sbr.rel (0) target = $region13
    $region12: #{mlp_forward.1} parent=1 // pred_region
      _
    $region13: #{mlp_forward.1} parent=1 // pred_fallthru
      _
    // Predicated region
    $region14: #{mlp_forward.1} parent=1 // pred_check
      _
    $region15: #{mlp_forward.1} parent=1 // pred_check_branch
      %21 = sbr.rel (0) target = $region17
    $region16: #{mlp_forward.1} parent=1 // pred_region
      %23 = vsyncadd [#allocation3], 0
      %s24 = sshll.u32 %s3, 4
      %s25 = int_to_ptr.hbm [resolvable:$true] %s24
      %s26 = sshll.u32 [#allocation2], 4
      %s27 = int_to_ptr.vmem [resolvable:$true] %s26
      %32 = dma.hbm_to_vmem [thread:$0]  %s25, 1024, %s27, [#allocation3], 64, 64, 4
    $region17: #{mlp_forward.1} parent=1 // pred_fallthru
      _
    // Predicated region
    $region18: #{mlp_forward.1} parent=1 // pred_check
      _
    $region19: #{mlp_forward.1} parent=1 // pred_check_branch
      %34 = sbr.rel (0) target = $region21
    $region20: #{mlp_forward.1} parent=1 // pred_region
      _
    $region21: #{mlp_forward.1} parent=1 // pred_fallthru
      _
    // Predicated region
    $region22: #{mlp_forward.1} parent=1 // pred_check
      _
    $region23: #{mlp_forward.1} parent=1 // pred_check_branch
      %36 = sbr.rel (0) target = $region25
    $region24: #{mlp_forward.1} parent=1 // pred_region
      %38 = vsyncadd [#allocation5], 0
      %s39 = sshll.u32 %s5, 4
      %s40 = int_to_ptr.hbm [resolvable:$true] %s39
      %s41 = sshll.u32 [#allocation4], 4
      %s42 = int_to_ptr.vmem [resolvable:$true] %s41
      %47 = dma.hbm_to_vmem [thread:$0]  %s40, 1024, %s42, [#allocation5], 64, 64, 4
    $region25: #{mlp_forward.1} parent=1 // pred_fallthru
      _
    // Predicated region
    $region26: #{mlp_forward.1} parent=1 // pred_check
      _
    $region27: #{mlp_forward.1} parent=1 // pred_check_branch
      %49 = sbr.rel (0) target = $region29
    $region28: #{mlp_forward.1} parent=1 // pred_region
      _
    $region29: #{mlp_forward.1} parent=1 // pred_fallthru
      _
    // Predicated region
    $region30: #{mlp_forward.1} parent=1 // pred_check
      _
    $region31: #{mlp_forward.1} parent=1 // pred_check_branch
      %51 = sbr.rel (0) target = $region33
    $region32: #{mlp_forward.1} parent=1 // pred_region
      %53 = dma.done [#allocation3], 1024
    $region33: #{mlp_forward.1} parent=1 // pred_fallthru
      _
    // Predicated region
    $region34: #{mlp_forward.1} parent=1 // pred_check
      _
    $region35: #{mlp_forward.1} parent=1 // pred_check_branch
      %55 = sbr.rel (0) target = $region37
    $region36: #{mlp_forward.1} parent=1 // pred_region
      %57 = dma.done [#allocation5], 1024
    $region37: #{mlp_forward.1} parent=1 // pred_fallthru
      _
    %v59 = vld [vmem:[%s0] sm:$0xff]
    %v60 = vld [vmem:[%s0 + $0x8] sm:$0xff]
    %v61 = vpack.c.bf16 %v60, %v59
    %v62 = vld [vmem:[%s1] sm:$0xf]
    %v63 = vld [vmem:[%s2] sm:$0x1]
    %v65 = vperm.slane %v63, 0
    %vm67 = vcmask 64512
    %v69 = vsel %vm67, %v61, 0
    %vm71 = vcmask 1043456
    %v73 = vsel %vm71, %v62, 0
    %75 = vmatpush.bf16.msra.mxu0 0
    %76 = vmatpush.bf16.msra.mxu0 0
    %77 = vmatpush.bf16.msra.mxu0 0
    %78 = vmatpush.bf16.msra.mxu0 0
    %79 = vmatpush.bf16.msra.mxu0 0
    %80 = vmatpush.bf16.msra.mxu0 0
    %81 = vmatpush.bf16.msra.mxu0 0
    %82 = vmatpush.bf16.msra.mxu0 %v73
    %83 = vmatmul.bf16.gmra.mxu0 %v69
    %v84 = vpop.f32.mrf.mxu0
    %v85 = vadd.f32 %v65, %v84
    %v86 = vpop.f32.mrf.mxu0
    %v87 = vadd.f32 %v65, %v86
    %88 = vdwg.mxu0
    %v89 = vpack.c.bf16 %v85, %v85
    %v90 = vpack.c.bf16 %v87, %v87
    %v91 = vunpack.c.l.bf16 %v89
    %v92 = vunpack.c.l.bf16 %v90
    %v93 = vmax.f32 %v91, 0.0
    %v94 = vmax.f32 %v92, 0.0
    %v95 = vpack.c.bf16 %v94, %v93
    %v96 = vld [vmem:[#allocation2] sm:$0xf]
    %v97 = vld [vmem:[#allocation2 + $0x4] sm:$0xf]
    %v98 = vld [vmem:[#allocation2 + $0x8] sm:$0xf]
    %v99 = vld [vmem:[#allocation2 + $0xc] sm:$0xf]
    %v100 = vld [vmem:[#allocation2 + $0x10] sm:$0xf]
    %v101 = vld [vmem:[#allocation2 + $0x14] sm:$0xf]
    %v102 = vld [vmem:[#allocation2 + $0x18] sm:$0xf]
    %v103 = vld [vmem:[#allocation2 + $0x1c] sm:$0xf]
    %v104 = vld [vmem:[#allocation2 + $0x20] sm:$0xf]
    %v105 = vld [vmem:[#allocation2 + $0x24] sm:$0xf]
    %v106 = vld [vmem:[#allocation2 + $0x28] sm:$0xf]
    %v107 = vld [vmem:[#allocation2 + $0x2c] sm:$0xf]
    %v108 = vld [vmem:[#allocation2 + $0x30] sm:$0xf]
    %v109 = vld [vmem:[#allocation2 + $0x34] sm:$0xf]
    %v110 = vld [vmem:[#allocation2 + $0x38] sm:$0xf]
    %v111 = vld [vmem:[#allocation2 + $0x3c] sm:$0xf]
    %v112 = vld [vmem:[%s4] sm:$0x1]
    %v114 = vperm.slane %v112, 0
    %v132 = vunpack.c.l.b16 %v96
    %v133 = vunpack.c.l.b16 %v97
    %v134 = vunpack.c.l.b16 %v98
    %v135 = vunpack.c.l.b16 %v99
    %v136 = vunpack.c.l.b16 %v100
    %v137 = vunpack.c.l.b16 %v101
    %v138 = vunpack.c.l.b16 %v102
    %v139 = vunpack.c.l.b16 %v103
    %v140 = vunpack.c.l.b16 %v104
    %v141 = vunpack.c.l.b16 %v105
    %v142 = vunpack.c.l.b16 %v106
    %v143 = vunpack.c.l.b16 %v107
    %v144 = vunpack.c.l.b16 %v108
    %v145 = vunpack.c.l.b16 %v109
    %v146 = vunpack.c.l.b16 %v110
    %v147 = vunpack.c.l.b16 %v111
    %v148 = vpack.c.b16 %v133, %v132
    %v149 = vpack.c.b16 %v135, %v134
    %v150 = vpack.c.b16 %v137, %v136
    %v151 = vpack.c.b16 %v139, %v138
    %v152 = vpack.c.b16 %v141, %v140
    %v153 = vpack.c.b16 %v143, %v142
    %v154 = vpack.c.b16 %v145, %v144
    %v155 = vpack.c.b16 %v147, %v146
    %164 = vmatpush.bf16.msra.mxu0 %v155
    %165 = vmatpush.bf16.msra.mxu0 %v154
    %166 = vmatpush.bf16.msra.mxu0 %v153
    %167 = vmatpush.bf16.msra.mxu0 %v152
    %168 = vmatpush.bf16.msra.mxu0 %v151
    %169 = vmatpush.bf16.msra.mxu0 %v150
    %170 = vmatpush.bf16.msra.mxu0 %v149
    %171 = vmatpush.bf16.msra.mxu0 %v148
    %172 = vmatmul.bf16.gmra.mxu0 %v95
    %v173 = vpop.f32.mrf.mxu0
    %v174 = vadd.f32 %v114, %v173
    %v175 = vpop.f32.mrf.mxu0
    %v176 = vadd.f32 %v114, %v175
    %177 = vdwg.mxu0
    %v178 = vpack.c.bf16 %v174, %v174
    %v179 = vpack.c.bf16 %v176, %v176
    %v180 = vunpack.c.l.bf16 %v178
    %v181 = vunpack.c.l.bf16 %v179
    %v182 = vmax.f32 %v180, 0.0
    %v183 = vmax.f32 %v181, 0.0
    %v184 = vpack.c.bf16 %v183, %v182
    %v185 = vld [vmem:[#allocation4] sm:$0xf]
    %v186 = vld [vmem:[#allocation4 + $0x4] sm:$0xf]
    %v187 = vld [vmem:[#allocation4 + $0x8] sm:$0xf]
    %v188 = vld [vmem:[#allocation4 + $0xc] sm:$0xf]
    %v189 = vld [vmem:[#allocation4 + $0x10] sm:$0xf]
    %v190 = vld [vmem:[#allocation4 + $0x14] sm:$0xf]
    %v191 = vld [vmem:[#allocation4 + $0x18] sm:$0xf]
    %v192 = vld [vmem:[#allocation4 + $0x1c] sm:$0xf]
    %v193 = vld [vmem:[#allocation4 + $0x20] sm:$0xf]
    %v194 = vld [vmem:[#allocation4 + $0x24] sm:$0xf]
    %v195 = vld [vmem:[#allocation4 + $0x28] sm:$0xf]
    %v196 = vld [vmem:[#allocation4 + $0x2c] sm:$0xf]
    %v197 = vld [vmem:[#allocation4 + $0x30] sm:$0xf]
    %v198 = vld [vmem:[#allocation4 + $0x34] sm:$0xf]
    %v199 = vld [vmem:[#allocation4 + $0x38] sm:$0xf]
    %v200 = vld [vmem:[#allocation4 + $0x3c] sm:$0xf]
    %v201 = vld [vmem:[%s6] sm:$0x1]
    %v203 = vperm.slane %v201, 0
    %v221 = vunpack.c.l.b16 %v185
    %v222 = vunpack.c.l.b16 %v186
    %v223 = vunpack.c.l.b16 %v187
    %v224 = vunpack.c.l.b16 %v188
    %v225 = vunpack.c.l.b16 %v189
    %v226 = vunpack.c.l.b16 %v190
    %v227 = vunpack.c.l.b16 %v191
    %v228 = vunpack.c.l.b16 %v192
    %v229 = vunpack.c.l.b16 %v193
    %v230 = vunpack.c.l.b16 %v194
    %v231 = vunpack.c.l.b16 %v195
    %v232 = vunpack.c.l.b16 %v196
    %v233 = vunpack.c.l.b16 %v197
    %v234 = vunpack.c.l.b16 %v198
    %v235 = vunpack.c.l.b16 %v199
    %v236 = vunpack.c.l.b16 %v200
    %v237 = vpack.c.b16 %v222, %v221
    %v238 = vpack.c.b16 %v224, %v223
    %v239 = vpack.c.b16 %v226, %v225
    %v240 = vpack.c.b16 %v228, %v227
    %v241 = vpack.c.b16 %v230, %v229
    %v242 = vpack.c.b16 %v232, %v231
    %v243 = vpack.c.b16 %v234, %v233
    %v244 = vpack.c.b16 %v236, %v235
    %253 = vmatpush.bf16.msra.mxu0 %v244
    %254 = vmatpush.bf16.msra.mxu0 %v243
    %255 = vmatpush.bf16.msra.mxu0 %v242
    %256 = vmatpush.bf16.msra.mxu0 %v241
    %257 = vmatpush.bf16.msra.mxu0 %v240
    %258 = vmatpush.bf16.msra.mxu0 %v239
    %259 = vmatpush.bf16.msra.mxu0 %v238
    %260 = vmatpush.bf16.msra.mxu0 %v237
    %261 = vmatmul.bf16.gmra.mxu0 %v184
    %v262 = vpop.f32.mrf.mxu0
    %v263 = vadd.f32 %v203, %v262
    %v264 = vpop.f32.mrf.mxu0
    %v265 = vadd.f32 %v203, %v264
    %266 = vdwg.mxu0
    %267 = vst [vmem:[%s7] sm:$0xff] %v263
    %268 = vst [vmem:[%s7 + $0x8] sm:$0xff] %v265
    // Predicated region
    $region38: #{mlp_forward.1} parent=1 // pred_check
      _
    $region39: #{mlp_forward.1} parent=1 // pred_check_branch
      %270 = sbr.rel (0) target = $region41
    $region40: #{mlp_forward.1} parent=1 // pred_region
      _
    $region41: #{mlp_forward.1} parent=1 // pred_fallthru
      _
    // Predicated region
    $region42: #{mlp_forward.1} parent=1 // pred_check
      _
    $region43: #{mlp_forward.1} parent=1 // pred_check_branch
      %272 = sbr.rel (0) target = $region45
    $region44: #{mlp_forward.1} parent=1 // pred_region
      _
    $region45: #{mlp_forward.1} parent=1 // pred_fallthru
      _
    %273 = vsyncpa [#allocation3], 1
    %274 = vsyncpa [#allocation5], 1

</llo_original>
